<compile_context>
chip_gen: v6e
topology: v6e:2x2x1
jax: 0.10.0
libtpu: 0.0.40
codegen_flags: <defaults>
</compile_context>

<pallas_src>
import jax
import jax.numpy as jnp
from jax.experimental import pallas as pl
from jax.experimental.pallas import tpu as pltpu


def _round_up(n, m):
    return ((n + m - 1) // m) * m


def _orthogonal(key, out_dim, in_dim, dtype=jnp.float32):
    """Deterministic orthogonal init (same spirit as torch.nn.init.orthogonal_)."""
    rows, cols = out_dim, in_dim
    flat = jax.random.normal(key, (max(rows, cols), min(rows, cols)), dtype=jnp.float32)
    q, r = jnp.linalg.qr(flat)
    q = q * jnp.sign(jnp.diagonal(r))
    if rows < cols:
        q = q.T
    return q[:rows, :cols].astype(dtype)  # (out_dim, in_dim), torch layout


def mlp_kernel(x_ref, w1_ref, b1_ref, w2_ref, b2_ref, w3_ref, o_ref):
    # Three MXU matmuls fused with f32 bias adds + tanh.
    # act_dtype (== w2 dtype, static) controls the tanh / dot-operand dtype:
    #   f32 params  -> everything f32 (exact; safe on v5e's f32-only EUP/VPU)
    #   bf16 params -> tanh and the 2nd/3rd dot operands in bf16 (v6e/v7x),
    #                  with f32 accumulation (preferred_element_type) and f32
    #                  bias adds.  x / w1 / the first dot stay f32 for accuracy.
    act_dtype = w2_ref.dtype
    x = x_ref[...]
    h = jnp.dot(x, w1_ref[...], preferred_element_type=jnp.float32)
    h = jnp.tanh((h + b1_ref[...]).astype(act_dtype))
    h = jnp.dot(h, w2_ref[...], preferred_element_type=jnp.float32)
    h = jnp.tanh((h + b2_ref[...]).astype(act_dtype))
    o = jnp.dot(h, w3_ref[...], preferred_element_type=jnp.float32)
    o_ref[...] = o.astype(o_ref.dtype)


def prepare_params(w1_oi, b1, w2_oi, b2, w3_oi, *, compute_dtype=jnp.float32):
    """Torch-layout (out, in) weights -> (in, out) kernel layout.

    w1 stays f32 (x is f32 and the first dot is tiny, keeping it accurate);
    w2/w3 are cast to `compute_dtype` (f32, or bf16 for MXU-operand / DMA
    savings -- fine on all of v5e/v6e/v7x since accumulation stays f32).
    Biases stay f32 and are added to the f32 accumulators.
    """
    w1 = jnp.asarray(w1_oi, jnp.float32).T                     # (in, hidden)
    b1p = jnp.asarray(b1, jnp.float32).reshape(1, -1)          # (1, hidden)
    w2 = jnp.asarray(w2_oi, jnp.float32).T.astype(compute_dtype)
    b2p = jnp.asarray(b2, jnp.float32).reshape(1, -1)
    w3 = jnp.asarray(w3_oi, jnp.float32).T.astype(compute_dtype)
    return (w1, b1p, w2, b2p, w3)


def mlp_forward(x, params, *, batch_tile=4096, num_cores=1):
    """x: (B, input_dim) f32.  Returns (B, output_dim) f32.

    num_cores: set 2 on v7x so the "parallel" batch axis spans both
    TensorCores (even grid length); leave 1 on v5e/v6e (single TC) to avoid
    needless extra grid steps.
    """
    w1, b1, w2, b2, w3 = params
    B, in_dim = x.shape
    hidden = w1.shape[1]
    out_dim = w3.shape[1]

    # Tile selection: TB is a multiple of 8 sublanes, the padded batch is an
    # exact multiple of TB (no garbage remainder tile), and the number of
    # tiles is a multiple of num_cores so megacore sharding is balanced.
    ncores = max(int(num_cores), 1)
    B8 = _round_up(B, 8)
    ntiles = _round_up(pl.cdiv(B8, batch_tile), ncores)
    TB = _round_up(pl.cdiv(B8, ntiles), 8)
    B_pad = TB * ntiles

    xp = x if B_pad == B else jnp.zeros((B_pad, in_dim), x.dtype).at[:B].set(x)

    flops = 2 * B_pad * (in_dim * hidden + hidden * hidden + hidden * out_dim)
    transcendentals = 2 * B_pad * hidden
    bytes_accessed = int(xp.nbytes + w1.nbytes + b1.nbytes + w2.nbytes
                         + b2.nbytes + w3.nbytes + B_pad * out_dim * 4)

    def run(single_buffer_weights):
        # Weights/biases: constant block index -> DMA'd once, VMEM-resident.
        # Single-buffer them when supported (no point double-buffering
        # constants; keeps resident-weight VMEM in check on v7x's 64 MiB).
        wkw = {"pipeline_mode": pl.Buffered(1)} if single_buffer_weights else {}
        const = lambda i: (0, 0)
        call = pl.pallas_call(
            mlp_kernel,
            out_shape=jax.ShapeDtypeStruct((B_pad, out_dim), jnp.float32),
            grid=(ntiles,),
            in_specs=[
                pl.BlockSpec((TB, in_dim), lambda i: (i, 0)),   # batch-tiled x
                pl.BlockSpec(w1.shape, const, **wkw),
                pl.BlockSpec(b1.shape, const, **wkw),
                pl.BlockSpec(w2.shape, const, **wkw),
                pl.BlockSpec(b2.shape, const, **wkw),
                pl.BlockSpec(w3.shape, const, **wkw),
            ],
            # Logical-width output (last dim == full array dim): no padded
            # writeback, no separate slice kernel afterwards.
            out_specs=pl.BlockSpec((TB, out_dim), lambda i: (i, 0)),
            compiler_params=pltpu.CompilerParams(
                dimension_semantics=("parallel",),              # megacore on v7x
            ),
            cost_estimate=pl.CostEstimate(
                flops=flops,
                transcendentals=transcendentals,
                bytes_accessed=bytes_accessed,
            ),
        )
        return call(xp, w1, b1, w2, b2, w3)

    try:
        out = run(True)
    except Exception:
        # pipeline_mode=pl.Buffered(1) not supported on this jax/libtpu combo:
        # fall back to default (double-buffered) constant weights.
        out = run(False)

    return out if B_pad == B else out[:B]


if __name__ == "__main__":
    # Shapes implied by the module: batch=8, input_dim=16, hidden_dim=32, output_dim=8
    B, input_dim, hidden_dim, output_dim = 8, 16, 32, 8

    key = jax.random.PRNGKey(0)
    kx, k1, kb1, k2, kb2, k3, kbig = jax.random.split(key, 7)

    x = jax.random.normal(kx, (B, input_dim), dtype=jnp.float32)

    # PyTorch nn.Linear weights are (out, in); orthogonal init, small uniform
    # biases; linear3 has bias=None in the module -> no bias term.
    w1_oi = _orthogonal(k1, hidden_dim, input_dim)
    b1 = (jax.random.uniform(kb1, (hidden_dim,)) - 0.5) * 0.2
    w2_oi = _orthogonal(k2, hidden_dim, hidden_dim)
    b2 = (jax.random.uniform(kb2, (hidden_dim,)) - 0.5) * 0.2
    w3_oi = _orthogonal(k3, output_dim, hidden_dim)

    def reference_mlp(xv):
        h = jnp.tanh(xv @ w1_oi.T + b1)
        h = jnp.tanh(h @ w2_oi.T + b2)
        return h @ w3_oi.T

    # --- f32 path (exact module semantics) ----------------------------------
    params_f32 = prepare_params(w1_oi, b1, w2_oi, b2, w3_oi,
                                compute_dtype=jnp.float32)
    out = jax.block_until_ready(mlp_forward(x, params_f32))
    ref = reference_mlp(x)
    assert out.shape == (B, output_dim)
    assert jnp.allclose(out, ref, atol=1e-5, rtol=1e-5), "f32 mismatch vs reference"

    # --- larger, non-multiple batch: multi-tile grid + zero-padded remainder -
    B_big = 1000
    xb = jax.random.normal(kbig, (B_big, input_dim), dtype=jnp.float32)
    out_big = jax.block_until_ready(mlp_forward(xb, params_f32, batch_tile=256))
    ref_big = reference_mlp(xb)
    assert out_big.shape == (B_big, output_dim)
    assert jnp.allclose(out_big, ref_big, atol=1e-4, rtol=1e-4), "batched mismatch"

    # --- even grid length (what num_cores=2 uses on v7x) ---------------------
    out_2c = jax.block_until_ready(mlp_forward(x, params_f32, num_cores=2))
    assert out_2c.shape == (B, output_dim)
    assert jnp.allclose(out_2c, ref, atol=1e-5, rtol=1e-5), "2-tile path mismatch"

    # --- bf16 MXU-operand path (x / first dot stay f32; tanh in bf16) --------
    params_bf16 = prepare_params(w1_oi, b1, w2_oi, b2, w3_oi,
                                 compute_dtype=jnp.bfloat16)
    out_bf16 = jax.block_until_ready(mlp_forward(x, params_bf16))
    assert out_bf16.shape == (B, output_dim)
    assert float(jnp.max(jnp.abs(out_bf16 - ref))) < 5e-2, "bf16 path diverged"

    print("KERNEL_OK")
</pallas_src>

<mosaic_0001>
module attributes {stable_mosaic.version = 11 : i64} {
  func.func @mlp_kernel(%arg0: i32, %arg1: memref<8x16xf32, #tpu.memory_space<vmem>>, %arg2: memref<16x32xf32, #tpu.memory_space<vmem>>, %arg3: memref<1x32xf32, #tpu.memory_space<vmem>>, %arg4: memref<32x32xf32, #tpu.memory_space<vmem>>, %arg5: memref<1x32xf32, #tpu.memory_space<vmem>>, %arg6: memref<32x8xf32, #tpu.memory_space<vmem>>, %arg7: memref<8x8xf32, #tpu.memory_space<vmem>>) attributes {dimension_semantics = [#tpu.dimension_semantics<parallel>], iteration_bounds = array<i64: 1>, scalar_prefetch = 0 : i64, scratch_operands = 0 : i64, tpu.core_type = #tpu.core_type<tc>, window_params = [{transform_indices = @transform_0, window_bounds = array<i64: 8, 16>}, {pipeline_mode = #tpu.pipeline_mode<synchronous>, transform_indices = @transform_1, window_bounds = array<i64: 16, 32>}, {pipeline_mode = #tpu.pipeline_mode<synchronous>, transform_indices = @transform_2, window_bounds = array<i64: 1, 32>}, {pipeline_mode = #tpu.pipeline_mode<synchronous>, transform_indices = @transform_3, window_bounds = array<i64: 32, 32>}, {pipeline_mode = #tpu.pipeline_mode<synchronous>, transform_indices = @transform_4, window_bounds = array<i64: 1, 32>}, {pipeline_mode = #tpu.pipeline_mode<synchronous>, transform_indices = @transform_5, window_bounds = array<i64: 32, 8>}, {transform_indices = @transform_6, window_bounds = array<i64: 8, 8>}]} {
    %c0 = arith.constant 0 : index
    %c0_0 = arith.constant 0 : index
    %0 = vector.load %arg1[%c0, %c0_0] : memref<8x16xf32, #tpu.memory_space<vmem>>, vector<8x16xf32>
    %c0_1 = arith.constant 0 : index
    %c0_2 = arith.constant 0 : index
    %1 = vector.load %arg2[%c0_1, %c0_2] : memref<16x32xf32, #tpu.memory_space<vmem>>, vector<16x32xf32>
    %cst = arith.constant dense<0.000000e+00> : vector<8x32xf32>
    %2 = tpu.matmul %0, %1, %cst {dimension_numbers = #tpu.dot_dimension_numbers<[1], [0], [0], [1], [0, 0, 1, 1], [], []>} : vector<8x16xf32>, vector<16x32xf32>, vector<8x32xf32> -> vector<8x32xf32>
    %c0_3 = arith.constant 0 : index
    %c0_4 = arith.constant 0 : index
    %3 = vector.load %arg3[%c0_3, %c0_4] : memref<1x32xf32, #tpu.memory_space<vmem>>, vector<1x32xf32>
    %4 = vector.broadcast %3 : vector<1x32xf32> to vector<8x32xf32>
    %5 = arith.addf %2, %4 : vector<8x32xf32>
    %6 = math.tanh %5 : vector<8x32xf32>
    %c0_5 = arith.constant 0 : index
    %c0_6 = arith.constant 0 : index
    %7 = vector.load %arg4[%c0_5, %c0_6] : memref<32x32xf32, #tpu.memory_space<vmem>>, vector<32x32xf32>
    %cst_7 = arith.constant dense<0.000000e+00> : vector<8x32xf32>
    %8 = tpu.matmul %6, %7, %cst_7 {dimension_numbers = #tpu.dot_dimension_numbers<[1], [0], [0], [1], [0, 0, 1, 1], [], []>} : vector<8x32xf32>, vector<32x32xf32>, vector<8x32xf32> -> vector<8x32xf32>
    %c0_8 = arith.constant 0 : index
    %c0_9 = arith.constant 0 : index
    %9 = vector.load %arg5[%c0_8, %c0_9] : memref<1x32xf32, #tpu.memory_space<vmem>>, vector<1x32xf32>
    %10 = vector.broadcast %9 : vector<1x32xf32> to vector<8x32xf32>
    %11 = arith.addf %8, %10 : vector<8x32xf32>
    %12 = math.tanh %11 : vector<8x32xf32>
    %c0_10 = arith.constant 0 : index
    %c0_11 = arith.constant 0 : index
    %13 = vector.load %arg6[%c0_10, %c0_11] : memref<32x8xf32, #tpu.memory_space<vmem>>, vector<32x8xf32>
    %cst_12 = arith.constant dense<0.000000e+00> : vector<8x8xf32>
    %14 = tpu.matmul %12, %13, %cst_12 {dimension_numbers = #tpu.dot_dimension_numbers<[1], [0], [0], [1], [0, 0, 1, 1], [], []>} : vector<8x32xf32>, vector<32x8xf32>, vector<8x8xf32> -> vector<8x8xf32>
    %c0_13 = arith.constant 0 : index
    %c0_14 = arith.constant 0 : index
    %15 = vector.load %arg7[%c0_13, %c0_14] : memref<8x8xf32, #tpu.memory_space<vmem>>, vector<8x8xf32>
    tpu.vector_store %arg7[%c0_13, %c0_14], %14 {strides = array<i32>} : memref<8x8xf32, #tpu.memory_space<vmem>>, vector<8x8xf32>,
    return
  }
  func.func @transform_0(%arg0: i32) -> (i32, i32) {
    %c0_i32 = arith.constant 0 : i32
    %c0_i32_0 = arith.constant 0 : i32
    return %arg0, %c0_i32 : i32, i32
  }
  func.func @transform_1(%arg0: i32) -> (i32, i32) {
    %c0_i32 = arith.constant 0 : i32
    %c0_i32_0 = arith.constant 0 : i32
    %c0_i32_1 = arith.constant 0 : i32
    return %c0_i32, %c0_i32_0 : i32, i32
  }
  func.func @transform_2(%arg0: i32) -> (i32, i32) {
    %c0_i32 = arith.constant 0 : i32
    %c0_i32_0 = arith.constant 0 : i32
    %c0_i32_1 = arith.constant 0 : i32
    return %c0_i32, %c0_i32_0 : i32, i32
  }
  func.func @transform_3(%arg0: i32) -> (i32, i32) {
    %c0_i32 = arith.constant 0 : i32
    %c0_i32_0 = arith.constant 0 : i32
    %c0_i32_1 = arith.constant 0 : i32
    return %c0_i32, %c0_i32_0 : i32, i32
  }
  func.func @transform_4(%arg0: i32) -> (i32, i32) {
    %c0_i32 = arith.constant 0 : i32
    %c0_i32_0 = arith.constant 0 : i32
    %c0_i32_1 = arith.constant 0 : i32
    return %c0_i32, %c0_i32_0 : i32, i32
  }
  func.func @transform_5(%arg0: i32) -> (i32, i32) {
    %c0_i32 = arith.constant 0 : i32
    %c0_i32_0 = arith.constant 0 : i32
    %c0_i32_1 = arith.constant 0 : i32
    return %c0_i32, %c0_i32_0 : i32, i32
  }
  func.func @transform_6(%arg0: i32) -> (i32, i32) {
    %c0_i32 = arith.constant 0 : i32
    %c0_i32_0 = arith.constant 0 : i32
    return %arg0, %c0_i32 : i32, i32
  }
}

module attributes {stable_mosaic.version = 11 : i64} {
  func.func @mlp_kernel(%arg0: i32, %arg1: memref<8x16xf32, #tpu.memory_space<vmem>>, %arg2: memref<16x32xf32, #tpu.memory_space<vmem>>, %arg3: memref<1x32xf32, #tpu.memory_space<vmem>>, %arg4: memref<32x32xf32, #tpu.memory_space<vmem>>, %arg5: memref<1x32xf32, #tpu.memory_space<vmem>>, %arg6: memref<32x8xf32, #tpu.memory_space<vmem>>, %arg7: memref<8x8xf32, #tpu.memory_space<vmem>>) attributes {dimension_semantics = [#tpu.dimension_semantics<parallel>], iteration_bounds = array<i64: 1>, scalar_prefetch = 0 : i64, scratch_operands = 0 : i64, tpu.core_type = #tpu.core_type<tc>, window_params = [{transform_indices = @transform_0, window_bounds = array<i64: 8, 16>}, {pipeline_mode = #tpu.pipeline_mode<synchronous>, transform_indices = @transform_1, window_bounds = array<i64: 16, 32>}, {pipeline_mode = #tpu.pipeline_mode<synchronous>, transform_indices = @transform_2, window_bounds = array<i64: 1, 32>}, {pipeline_mode = #tpu.pipeline_mode<synchronous>, transform_indices = @transform_3, window_bounds = array<i64: 32, 32>}, {pipeline_mode = #tpu.pipeline_mode<synchronous>, transform_indices = @transform_4, window_bounds = array<i64: 1, 32>}, {pipeline_mode = #tpu.pipeline_mode<synchronous>, transform_indices = @transform_5, window_bounds = array<i64: 32, 8>}, {transform_indices = @transform_6, window_bounds = array<i64: 8, 8>}]} {
    %c0 = arith.constant 0 : index
    %c0_0 = arith.constant 0 : index
    %0 = vector.load %arg1[%c0, %c0_0] : memref<8x16xf32, #tpu.memory_space<vmem>>, vector<8x16xf32>
    %c0_1 = arith.constant 0 : index
    %c0_2 = arith.constant 0 : index
    %1 = vector.load %arg2[%c0_1, %c0_2] : memref<16x32xf32, #tpu.memory_space<vmem>>, vector<16x32xf32>
    %cst = arith.constant dense<0.000000e+00> : vector<8x32xf32>
    %2 = tpu.matmul %0, %1, %cst {dimension_numbers = #tpu.dot_dimension_numbers<[1], [0], [0], [1], [0, 0, 1, 1], [], []>} : vector<8x16xf32>, vector<16x32xf32>, vector<8x32xf32> -> vector<8x32xf32>
    %c0_3 = arith.constant 0 : index
    %c0_4 = arith.constant 0 : index
    %3 = vector.load %arg3[%c0_3, %c0_4] : memref<1x32xf32, #tpu.memory_space<vmem>>, vector<1x32xf32>
    %4 = vector.broadcast %3 : vector<1x32xf32> to vector<8x32xf32>
    %5 = arith.addf %2, %4 : vector<8x32xf32>
    %6 = math.tanh %5 : vector<8x32xf32>
    %c0_5 = arith.constant 0 : index
    %c0_6 = arith.constant 0 : index
    %7 = vector.load %arg4[%c0_5, %c0_6] : memref<32x32xf32, #tpu.memory_space<vmem>>, vector<32x32xf32>
    %cst_7 = arith.constant dense<0.000000e+00> : vector<8x32xf32>
    %8 = tpu.matmul %6, %7, %cst_7 {dimension_numbers = #tpu.dot_dimension_numbers<[1], [0], [0], [1], [0, 0, 1, 1], [], []>} : vector<8x32xf32>, vector<32x32xf32>, vector<8x32xf32> -> vector<8x32xf32>
    %c0_8 = arith.constant 0 : index
    %c0_9 = arith.constant 0 : index
    %9 = vector.load %arg5[%c0_8, %c0_9] : memref<1x32xf32, #tpu.memory_space<vmem>>, vector<1x32xf32>
    %10 = vector.broadcast %9 : vector<1x32xf32> to vector<8x32xf32>
    %11 = arith.addf %8, %10 : vector<8x32xf32>
    %12 = math.tanh %11 : vector<8x32xf32>
    %c0_10 = arith.constant 0 : index
    %c0_11 = arith.constant 0 : index
    %13 = vector.load %arg6[%c0_10, %c0_11] : memref<32x8xf32, #tpu.memory_space<vmem>>, vector<32x8xf32>
    %cst_12 = arith.constant dense<0.000000e+00> : vector<8x8xf32>
    %14 = tpu.matmul %12, %13, %cst_12 {dimension_numbers = #tpu.dot_dimension_numbers<[1], [0], [0], [1], [0, 0, 1, 1], [], []>} : vector<8x32xf32>, vector<32x8xf32>, vector<8x8xf32> -> vector<8x8xf32>
    %c0_13 = arith.constant 0 : index
    %c0_14 = arith.constant 0 : index
    %15 = vector.load %arg7[%c0_13, %c0_14] : memref<8x8xf32, #tpu.memory_space<vmem>>, vector<8x8xf32>
    tpu.vector_store %arg7[%c0_13, %c0_14], %14 {strides = array<i32>} : memref<8x8xf32, #tpu.memory_space<vmem>>, vector<8x8xf32>,
    return
  }
  func.func @transform_0(%arg0: i32) -> (i32, i32) {
    %c0_i32 = arith.constant 0 : i32
    %c0_i32_0 = arith.constant 0 : i32
    return %arg0, %c0_i32 : i32, i32
  }
  func.func @transform_1(%arg0: i32) -> (i32, i32) {
    %c0_i32 = arith.constant 0 : i32
    %c0_i32_0 = arith.constant 0 : i32
    %c0_i32_1 = arith.constant 0 : i32
    return %c0_i32, %c0_i32_0 : i32, i32
  }
  func.func @transform_2(%arg0: i32) -> (i32, i32) {
    %c0_i32 = arith.constant 0 : i32
    %c0_i32_0 = arith.constant 0 : i32
    %c0_i32_1 = arith.constant 0 : i32
    return %c0_i32, %c0_i32_0 : i32, i32
  }
  func.func @transform_3(%arg0: i32) -> (i32, i32) {
    %c0_i32 = arith.constant 0 : i32
    %c0_i32_0 = arith.constant 0 : i32
    %c0_i32_1 = arith.constant 0 : i32
    return %c0_i32, %c0_i32_0 : i32, i32
  }
  func.func @transform_4(%arg0: i32) -> (i32, i32) {
    %c0_i32 = arith.constant 0 : i32
    %c0_i32_0 = arith.constant 0 : i32
    %c0_i32_1 = arith.constant 0 : i32
    return %c0_i32, %c0_i32_0 : i32, i32
  }
  func.func @transform_5(%arg0: i32) -> (i32, i32) {
    %c0_i32 = arith.constant 0 : i32
    %c0_i32_0 = arith.constant 0 : i32
    %c0_i32_1 = arith.constant 0 : i32
    return %c0_i32, %c0_i32_0 : i32, i32
  }
  func.func @transform_6(%arg0: i32) -> (i32, i32) {
    %c0_i32 = arith.constant 0 : i32
    %c0_i32_0 = arith.constant 0 : i32
    return %arg0, %c0_i32 : i32, i32
  }
}

</mosaic_0001>

<llo_original>
// kernel: tpu_custom_call.1
$region0: #{tpu_custom_call.1}
  #allocation0 [shape = 'u32[]', space=smem, size = 0x4, offset = 0x4, fixed_abs, tag = 'smem constant byte address 0x4 - core index']
  #allocation1 [shape = 'u32[144,128]{1,0:T(1,128)}', space=vmem, size = 0x12000, scoped, tag = 'internal scratch']
  %s0 = inlined_call_operand.vmem [shape: f32[8,16], index: 0, kind: input, shape index: {}]
  %s1 = inlined_call_operand.hbm [shape: f32[16,32], index: 1, kind: input, shape index: {}]
  %s2 = inlined_call_operand.vmem [shape: f32[1,32], index: 2, kind: input, shape index: {}]
  %s3 = inlined_call_operand.vmem [shape: f32[32,32], index: 3, kind: input, shape index: {}]
  %s4 = inlined_call_operand.hbm [shape: f32[1,32], index: 4, kind: input, shape index: {}]
  %s5 = inlined_call_operand.vmem [shape: f32[32,8], index: 5, kind: input, shape index: {}]
  %s6 = inlined_call_operand.hbm [shape: f32[8,8], index: 6, kind: output, shape index: {}]
  %s7 = sld [smem:[#allocation0]]
  $region42: #{tpu_custom_call.1} parent=0
    _
  %s9 = ssub.s32 1, %s7
  %s10 = scalar_select 0, %s9, %s7
  $region1: #{tpu_custom_call.1} parent=0
    #allocation2 [shape = 'u8[8192]{0}', space=vmem, size = 0x2000, scoped, tag = 'input window, operand 1, single buffered']
    #allocation3 [shape = 's32[1]{0}', space=sflag, size = 0x4, scoped, tag = 'scoped memory for tpu_custom_call.1']
    #allocation4 [shape = 's32[1]{0}', space=sflag, size = 0x4, scoped, tag = 'scoped memory for tpu_custom_call.1']
    #allocation5 [shape = 'u8[512]{0}', space=vmem, size = 0x400, scoped, tag = 'input window, operand 4, single buffered']
    #allocation6 [shape = 's32[1]{0}', space=sflag, size = 0x4, scoped, tag = 'scoped memory for tpu_custom_call.1']
    #allocation7 [shape = 'u8[4096]{0}', space=vmem, size = 0x1000, scoped, tag = 'output window, operand 0, single buffered']
    %11 = vsyncpa [#allocation3], 0
    %12 = vsyncpa [#allocation6], 0
    %13 = vsyncpa [#allocation4], 0
    // Predicated region
    $region2: #{tpu_custom_call.1} parent=1 // pred_check
      _
    $region3: #{tpu_custom_call.1} parent=1 // pred_check_branch
      %15 = sbr.rel (0) target = $region5
    $region4: #{tpu_custom_call.1} parent=1 // pred_region
      _
    $region5: #{tpu_custom_call.1} parent=1 // pred_fallthru
      _
    // Predicated region
    $region6: #{tpu_custom_call.1} parent=1 // pred_check
      _
    $region7: #{tpu_custom_call.1} parent=1 // pred_check_branch
      %17 = sbr.rel (0) target = $region9
    $region8: #{tpu_custom_call.1} parent=1 // pred_region
      %s19 = ssub.s32 256, 256
      %20 = vsyncadd [#allocation3], %s19
      %s21 = sshll.u32 [#allocation2], 4
      %s22 = int_to_ptr.vmem [resolvable:$true] %s21
      %27 = dma.hbm_to_vmem [thread:$0]  %s1, 256, %s22, [#allocation3], 128, 128, 8
    $region9: #{tpu_custom_call.1} parent=1 // pred_fallthru
      _
    // Predicated region
    $region10: #{tpu_custom_call.1} parent=1 // pred_check
      _
    $region11: #{tpu_custom_call.1} parent=1 // pred_check_branch
      %29 = sbr.rel (0) target = $region13
    $region12: #{tpu_custom_call.1} parent=1 // pred_region
      _
    $region13: #{tpu_custom_call.1} parent=1 // pred_fallthru
      _
    // Predicated region
    $region14: #{tpu_custom_call.1} parent=1 // pred_check
      _
    $region15: #{tpu_custom_call.1} parent=1 // pred_check_branch
      %31 = sbr.rel (0) target = $region17
    $region16: #{tpu_custom_call.1} parent=1 // pred_region
      _
    $region17: #{tpu_custom_call.1} parent=1 // pred_fallthru
      _
    // Predicated region
    $region18: #{tpu_custom_call.1} parent=1 // pred_check
      _
    $region19: #{tpu_custom_call.1} parent=1 // pred_check_branch
      %33 = sbr.rel (0) target = $region21
    $region20: #{tpu_custom_call.1} parent=1 // pred_region
      %s35 = ssub.s32 16, 16
      %36 = vsyncadd [#allocation6], %s35
      %s38 = sshll.u32 [#allocation5], 4
      %s39 = int_to_ptr.vmem [resolvable:$true] %s38
      %41 = dma.hbm_to_vmem [thread:$0]  %s4, 16, %s39, [#allocation6]
    $region21: #{tpu_custom_call.1} parent=1 // pred_fallthru
      _
    // Predicated region
    $region22: #{tpu_custom_call.1} parent=1 // pred_check
      _
    $region23: #{tpu_custom_call.1} parent=1 // pred_check_branch
      %43 = sbr.rel (0) target = $region25
    $region24: #{tpu_custom_call.1} parent=1 // pred_region
      _
    $region25: #{tpu_custom_call.1} parent=1 // pred_fallthru
      _
    // Predicated region
    $region26: #{tpu_custom_call.1} parent=1 // pred_check
      _
    $region27: #{tpu_custom_call.1} parent=1 // pred_check_branch
      %45 = sbr.rel (0) target = $region29
    $region28: #{tpu_custom_call.1} parent=1 // pred_region
      %46 = dma.done [#allocation3], 256
    $region29: #{tpu_custom_call.1} parent=1 // pred_fallthru
      _
    // Predicated region
    $region30: #{tpu_custom_call.1} parent=1 // pred_check
      _
    $region31: #{tpu_custom_call.1} parent=1 // pred_check_branch
      %48 = sbr.rel (0) target = $region33
    $region32: #{tpu_custom_call.1} parent=1 // pred_region
      %49 = dma.done [#allocation6], 16
    $region33: #{tpu_custom_call.1} parent=1 // pred_fallthru
      _
    %v50 = vld [vmem:[%s0] sm:$0xff]
    %v51 = vld [vmem:[#allocation2] sm:$0xff]
    %v52 = vld [vmem:[#allocation2 + $0x8] sm:$0xff]
    %v53 = vld [vmem:[%s2] sm:$0x1]
    %v55 = vlaneseq
    %v56 = vshrl.u32 %v55, 7
    %v57 = vsub.s32 0, %v56
    %v58 = vrot.slane %v53, %v57
    %vm60 = vcmask 130048
    %v62 = vsel %vm60, %v50, 0
    %64 = vmatprep.subr.mxu0 0.0
    %65 = vmatpush1.msra.mxu0 0.0
    %66 = vmatprep.subr.mxu0 0.0
    %67 = vmatpush1.msra.mxu0 0.0
    %68 = vmatprep.subr.mxu0 0.0
    %69 = vmatpush1.msra.mxu0 0.0
    %70 = vmatprep.subr.mxu0 0.0
    %71 = vmatpush1.msra.mxu0 0.0
    %72 = vmatprep.subr.mxu0 0.0
    %73 = vmatpush1.msra.mxu0 0.0
    %74 = vmatprep.subr.mxu0 0.0
    %75 = vmatpush1.msra.mxu0 0.0
    %76 = vmatprep.subr.mxu0 0.0
    %77 = vmatpush1.msra.mxu0 0.0
    %78 = vmatprep.subr.mxu0 0.0
    %79 = vmatpush1.msra.mxu0 0.0
    %80 = vmatprep.subr.mxu0 0.0
    %81 = vmatpush1.msra.mxu0 0.0
    %82 = vmatprep.subr.mxu0 0.0
    %83 = vmatpush1.msra.mxu0 0.0
    %84 = vmatprep.subr.mxu0 0.0
    %85 = vmatpush1.msra.mxu0 0.0
    %86 = vmatprep.subr.mxu0 0.0
    %87 = vmatpush1.msra.mxu0 0.0
    %88 = vmatprep.subr.mxu0 0.0
    %89 = vmatpush1.msra.mxu0 0.0
    %90 = vmatprep.subr.mxu0 0.0
    %91 = vmatpush1.msra.mxu0 0.0
    %92 = vmatprep.subr.mxu0 0.0
    %93 = vmatpush1.msra.mxu0 %v52
    %94 = vmatprep.subr.mxu0 0.0
    %95 = vmatpush1.msra.mxu0 %v51
    %96 = vmatprep.subr.mxu0 0.0
    %97 = vmatpush2.msra.mxu0 0.0
    %98 = vmatprep.subr.mxu0 0.0
    %99 = vmatpush2.msra.mxu0 0.0
    %100 = vmatprep.subr.mxu0 0.0
    %101 = vmatpush2.msra.mxu0 0.0
    %102 = vmatprep.subr.mxu0 0.0
    %103 = vmatpush2.msra.mxu0 0.0
    %104 = vmatprep.subr.mxu0 0.0
    %105 = vmatpush2.msra.mxu0 0.0
    %106 = vmatprep.subr.mxu0 0.0
    %107 = vmatpush2.msra.mxu0 0.0
    %108 = vmatprep.subr.mxu0 0.0
    %109 = vmatpush2.msra.mxu0 0.0
    %110 = vmatprep.subr.mxu0 0.0
    %111 = vmatpush2.msra.mxu0 0.0
    %112 = vmatprep.subr.mxu0 0.0
    %113 = vmatpush2.msra.mxu0 0.0
    %114 = vmatprep.subr.mxu0 0.0
    %115 = vmatpush2.msra.mxu0 0.0
    %116 = vmatprep.subr.mxu0 0.0
    %117 = vmatpush2.msra.mxu0 0.0
    %118 = vmatprep.subr.mxu0 0.0
    %119 = vmatpush2.msra.mxu0 0.0
    %120 = vmatprep.subr.mxu0 0.0
    %121 = vmatpush2.msra.mxu0 0.0
    %122 = vmatprep.subr.mxu0 0.0
    %123 = vmatpush2.msra.mxu0 0.0
    %124 = vmatprep.subr.mxu0 0.0
    %125 = vmatpush2.msra.mxu0 0.0
    %126 = vmatprep.subr.mxu0 0.0
    %127 = vmatpush2.msra.mxu0 0.0
    %128 = vmatprep.mubr.f32.mxu0 0.0
    %129 = vmatmul.mubr.f32.gmra.mxu0 %v62
    %v130 = vpop.f32.mrf.mxu0
    %v131 = vadd.f32 %v58, %v130
    %v132 = vpop.f32.mrf.mxu0
    %133 = vdwg.mxu0
    %v134 = vtanh.pop %v131
    %v135 = vld [vmem:[%s3] sm:$0xff]
    %v136 = vld [vmem:[%s3 + $0x8] sm:$0xff]
    %v137 = vld [vmem:[%s3 + $0x10] sm:$0xff]
    %v138 = vld [vmem:[%s3 + $0x18] sm:$0xff]
    %v139 = vld [vmem:[#allocation5] sm:$0x1]
    %v141 = vlaneseq
    %v142 = vshrl.u32 %v141, 7
    %v143 = vsub.s32 0, %v142
    %v144 = vrot.slane %v139, %v143
    %vm146 = vcmask 261120
    %v148 = vsel %vm146, %v134, 0
    %150 = vmatprep.subr.mxu0 0.0
    %151 = vmatpush1.msra.mxu0 0.0
    %152 = vmatprep.subr.mxu0 0.0
    %153 = vmatpush1.msra.mxu0 0.0
    %154 = vmatprep.subr.mxu0 0.0
    %155 = vmatpush1.msra.mxu0 0.0
    %156 = vmatprep.subr.mxu0 0.0
    %157 = vmatpush1.msra.mxu0 0.0
    %158 = vmatprep.subr.mxu0 0.0
    %159 = vmatpush1.msra.mxu0 0.0
    %160 = vmatprep.subr.mxu0 0.0
    %161 = vmatpush1.msra.mxu0 0.0
    %162 = vmatprep.subr.mxu0 0.0
    %163 = vmatpush1.msra.mxu0 0.0
    %164 = vmatprep.subr.mxu0 0.0
    %165 = vmatpush1.msra.mxu0 0.0
    %166 = vmatprep.subr.mxu0 0.0
    %167 = vmatpush1.msra.mxu0 0.0
    %168 = vmatprep.subr.mxu0 0.0
    %169 = vmatpush1.msra.mxu0 0.0
    %170 = vmatprep.subr.mxu0 0.0
    %171 = vmatpush1.msra.mxu0 0.0
    %172 = vmatprep.subr.mxu0 0.0
    %173 = vmatpush1.msra.mxu0 0.0
    %174 = vmatprep.subr.mxu0 0.0
    %175 = vmatpush1.msra.mxu0 %v138
    %176 = vmatprep.subr.mxu0 0.0
    %177 = vmatpush1.msra.mxu0 %v137
    %178 = vmatprep.subr.mxu0 0.0
    %179 = vmatpush1.msra.mxu0 %v136
    %180 = vmatprep.subr.mxu0 0.0
    %181 = vmatpush1.msra.mxu0 %v135
    %182 = vmatprep.subr.mxu0 0.0
    %183 = vmatpush2.msra.mxu0 0.0
    %184 = vmatprep.subr.mxu0 0.0
    %185 = vmatpush2.msra.mxu0 0.0
    %186 = vmatprep.subr.mxu0 0.0
    %187 = vmatpush2.msra.mxu0 0.0
    %188 = vmatprep.subr.mxu0 0.0
    %189 = vmatpush2.msra.mxu0 0.0
    %190 = vmatprep.subr.mxu0 0.0
    %191 = vmatpush2.msra.mxu0 0.0
    %192 = vmatprep.subr.mxu0 0.0
    %193 = vmatpush2.msra.mxu0 0.0
    %194 = vmatprep.subr.mxu0 0.0
    %195 = vmatpush2.msra.mxu0 0.0
    %196 = vmatprep.subr.mxu0 0.0
    %197 = vmatpush2.msra.mxu0 0.0
    %198 = vmatprep.subr.mxu0 0.0
    %199 = vmatpush2.msra.mxu0 0.0
    %200 = vmatprep.subr.mxu0 0.0
    %201 = vmatpush2.msra.mxu0 0.0
    %202 = vmatprep.subr.mxu0 0.0
    %203 = vmatpush2.msra.mxu0 0.0
    %204 = vmatprep.subr.mxu0 0.0
    %205 = vmatpush2.msra.mxu0 0.0
    %206 = vmatprep.subr.mxu0 0.0
    %207 = vmatpush2.msra.mxu0 0.0
    %208 = vmatprep.subr.mxu0 0.0
    %209 = vmatpush2.msra.mxu0 0.0
    %210 = vmatprep.subr.mxu0 0.0
    %211 = vmatpush2.msra.mxu0 0.0
    %212 = vmatprep.subr.mxu0 0.0
    %213 = vmatpush2.msra.mxu0 0.0
    %214 = vmatprep.mubr.f32.mxu0 0.0
    %215 = vmatmul.mubr.f32.gmra.mxu0 %v148
    %v216 = vpop.f32.mrf.mxu0
    %v217 = vadd.f32 %v144, %v216
    %v218 = vpop.f32.mrf.mxu0
    %219 = vdwg.mxu0
    %v220 = vtanh.pop %v217
    %v221 = vld [vmem:[%s5] sm:$0xff]
    %v222 = vld [vmem:[%s5 + $0x8] sm:$0xff]
    %v223 = vld [vmem:[%s5 + $0x10] sm:$0xff]
    %v224 = vld [vmem:[%s5 + $0x18] sm:$0xff]
    %v226 = vsel %vm146, %v220, 0
    %228 = vmatprep.subr.mxu0 0.0
    %229 = vmatpush1.msra.mxu0 0.0
    %230 = vmatprep.subr.mxu0 0.0
    %231 = vmatpush1.msra.mxu0 0.0
    %232 = vmatprep.subr.mxu0 0.0
    %233 = vmatpush1.msra.mxu0 0.0
    %234 = vmatprep.subr.mxu0 0.0
    %235 = vmatpush1.msra.mxu0 0.0
    %236 = vmatprep.subr.mxu0 0.0
    %237 = vmatpush1.msra.mxu0 0.0
    %238 = vmatprep.subr.mxu0 0.0
    %239 = vmatpush1.msra.mxu0 0.0
    %240 = vmatprep.subr.mxu0 0.0
    %241 = vmatpush1.msra.mxu0 0.0
    %242 = vmatprep.subr.mxu0 0.0
    %243 = vmatpush1.msra.mxu0 0.0
    %244 = vmatprep.subr.mxu0 0.0
    %245 = vmatpush1.msra.mxu0 0.0
    %246 = vmatprep.subr.mxu0 0.0
    %247 = vmatpush1.msra.mxu0 0.0
    %248 = vmatprep.subr.mxu0 0.0
    %249 = vmatpush1.msra.mxu0 0.0
    %250 = vmatprep.subr.mxu0 0.0
    %251 = vmatpush1.msra.mxu0 0.0
    %252 = vmatprep.subr.mxu0 0.0
    %253 = vmatpush1.msra.mxu0 %v224
    %254 = vmatprep.subr.mxu0 0.0
    %255 = vmatpush1.msra.mxu0 %v223
    %256 = vmatprep.subr.mxu0 0.0
    %257 = vmatpush1.msra.mxu0 %v222
    %258 = vmatprep.subr.mxu0 0.0
    %259 = vmatpush1.msra.mxu0 %v221
    %260 = vmatprep.subr.mxu0 0.0
    %261 = vmatpush2.msra.mxu0 0.0
    %262 = vmatprep.subr.mxu0 0.0
    %263 = vmatpush2.msra.mxu0 0.0
    %264 = vmatprep.subr.mxu0 0.0
    %265 = vmatpush2.msra.mxu0 0.0
    %266 = vmatprep.subr.mxu0 0.0
    %267 = vmatpush2.msra.mxu0 0.0
    %268 = vmatprep.subr.mxu0 0.0
    %269 = vmatpush2.msra.mxu0 0.0
    %270 = vmatprep.subr.mxu0 0.0
    %271 = vmatpush2.msra.mxu0 0.0
    %272 = vmatprep.subr.mxu0 0.0
    %273 = vmatpush2.msra.mxu0 0.0
    %274 = vmatprep.subr.mxu0 0.0
    %275 = vmatpush2.msra.mxu0 0.0
    %276 = vmatprep.subr.mxu0 0.0
    %277 = vmatpush2.msra.mxu0 0.0
    %278 = vmatprep.subr.mxu0 0.0
    %279 = vmatpush2.msra.mxu0 0.0
    %280 = vmatprep.subr.mxu0 0.0
    %281 = vmatpush2.msra.mxu0 0.0
    %282 = vmatprep.subr.mxu0 0.0
    %283 = vmatpush2.msra.mxu0 0.0
    %284 = vmatprep.subr.mxu0 0.0
    %285 = vmatpush2.msra.mxu0 0.0
    %286 = vmatprep.subr.mxu0 0.0
    %287 = vmatpush2.msra.mxu0 0.0
    %288 = vmatprep.subr.mxu0 0.0
    %289 = vmatpush2.msra.mxu0 0.0
    %290 = vmatprep.subr.mxu0 0.0
    %291 = vmatpush2.msra.mxu0 0.0
    %292 = vmatprep.mubr.f32.mxu0 0.0
    %293 = vmatmul.mubr.f32.gmra.mxu0 %v226
    %v294 = vpop.f32.mrf.mxu0
    %v295 = vadd.f32 0.0, %v294
    %v296 = vpop.f32.mrf.mxu0
    %297 = vdwg.mxu0
    %vm298 = vcmask 64512
    %299 = vst.msk [vmem:[#allocation7] sm:$0xff] %vm298, %v295
    // Predicated region
    $region34: #{tpu_custom_call.1} parent=1 // pred_check
      _
    $region35: #{tpu_custom_call.1} parent=1 // pred_check_branch
      %301 = sbr.rel (0) target = $region37
    $region36: #{tpu_custom_call.1} parent=1 // pred_region
      %s303 = ssub.s32 128, 128
      %304 = vsyncadd [#allocation4], %s303
      %s306 = sshll.u32 [#allocation7], 4
      %s307 = int_to_ptr.vmem [resolvable:$true] %s306
      %309 = dma.vmem_to_hbm [thread:$0]  %s307, 128, %s6, [#allocation4]
    $region37: #{tpu_custom_call.1} parent=1 // pred_fallthru
      _
    // Predicated region
    $region38: #{tpu_custom_call.1} parent=1 // pred_check
      _
    $region39: #{tpu_custom_call.1} parent=1 // pred_check_branch
      %311 = sbr.rel (0) target = $region41
    $region40: #{tpu_custom_call.1} parent=1 // pred_region
      %312 = dma.done [#allocation4], 128
    $region41: #{tpu_custom_call.1} parent=1 // pred_fallthru
      _
    %313 = vsyncpa [#allocation3], 1
    %314 = vsyncpa [#allocation6], 1
    %315 = vsyncpa [#allocation4], 1

// kernel: tpu_custom_call.1
$region0: #{tpu_custom_call.1}
  #allocation0 [shape = 'u32[]', space=smem, size = 0x4, offset = 0x4, fixed_abs, tag = 'smem constant byte address 0x4 - core index']
  #allocation1 [shape = 'u32[144,128]{1,0:T(1,128)}', space=vmem, size = 0x12000, scoped, tag = 'internal scratch']
  %s0 = inlined_call_operand.vmem [shape: f32[8,16], index: 0, kind: input, shape index: {}]
  %s1 = inlined_call_operand.hbm [shape: f32[16,32], index: 1, kind: input, shape index: {}]
  %s2 = inlined_call_operand.vmem [shape: f32[1,32], index: 2, kind: input, shape index: {}]
  %s3 = inlined_call_operand.vmem [shape: f32[32,32], index: 3, kind: input, shape index: {}]
  %s4 = inlined_call_operand.hbm [shape: f32[1,32], index: 4, kind: input, shape index: {}]
  %s5 = inlined_call_operand.vmem [shape: f32[32,8], index: 5, kind: input, shape index: {}]
  %s6 = inlined_call_operand.hbm [shape: f32[8,8], index: 6, kind: output, shape index: {}]
  %s7 = sld [smem:[#allocation0]]
  $region42: #{tpu_custom_call.1} parent=0
    _
  %s9 = ssub.s32 1, %s7
  %s10 = scalar_select 0, %s9, %s7
  $region1: #{tpu_custom_call.1} parent=0
    #allocation2 [shape = 'u8[8192]{0}', space=vmem, size = 0x2000, scoped, tag = 'input window, operand 1, single buffered']
    #allocation3 [shape = 's32[1]{0}', space=sflag, size = 0x4, scoped, tag = 'scoped memory for tpu_custom_call.1']
    #allocation4 [shape = 's32[1]{0}', space=sflag, size = 0x4, scoped, tag = 'scoped memory for tpu_custom_call.1']
    #allocation5 [shape = 'u8[512]{0}', space=vmem, size = 0x400, scoped, tag = 'input window, operand 4, single buffered']
    #allocation6 [shape = 's32[1]{0}', space=sflag, size = 0x4, scoped, tag = 'scoped memory for tpu_custom_call.1']
    #allocation7 [shape = 'u8[4096]{0}', space=vmem, size = 0x1000, scoped, tag = 'output window, operand 0, single buffered']
    %11 = vsyncpa [#allocation3], 0
    %12 = vsyncpa [#allocation6], 0
    %13 = vsyncpa [#allocation4], 0
    // Predicated region
    $region2: #{tpu_custom_call.1} parent=1 // pred_check
      _
    $region3: #{tpu_custom_call.1} parent=1 // pred_check_branch
      %15 = sbr.rel (0) target = $region5
    $region4: #{tpu_custom_call.1} parent=1 // pred_region
      _
    $region5: #{tpu_custom_call.1} parent=1 // pred_fallthru
      _
    // Predicated region
    $region6: #{tpu_custom_call.1} parent=1 // pred_check
      _
    $region7: #{tpu_custom_call.1} parent=1 // pred_check_branch
      %17 = sbr.rel (0) target = $region9
    $region8: #{tpu_custom_call.1} parent=1 // pred_region
      %s19 = ssub.s32 256, 256
      %20 = vsyncadd [#allocation3], %s19
      %s21 = sshll.u32 [#allocation2], 4
      %s22 = int_to_ptr.vmem [resolvable:$true] %s21
      %27 = dma.hbm_to_vmem [thread:$0]  %s1, 256, %s22, [#allocation3], 128, 128, 8
    $region9: #{tpu_custom_call.1} parent=1 // pred_fallthru
      _
    // Predicated region
    $region10: #{tpu_custom_call.1} parent=1 // pred_check
      _
    $region11: #{tpu_custom_call.1} parent=1 // pred_check_branch
      %29 = sbr.rel (0) target = $region13
    $region12: #{tpu_custom_call.1} parent=1 // pred_region
      _
    $region13: #{tpu_custom_call.1} parent=1 // pred_fallthru
      _
    // Predicated region
    $region14: #{tpu_custom_call.1} parent=1 // pred_check
      _
    $region15: #{tpu_custom_call.1} parent=1 // pred_check_branch
      %31 = sbr.rel (0) target = $region17
    $region16: #{tpu_custom_call.1} parent=1 // pred_region
      _
    $region17: #{tpu_custom_call.1} parent=1 // pred_fallthru
      _
    // Predicated region
    $region18: #{tpu_custom_call.1} parent=1 // pred_check
      _
    $region19: #{tpu_custom_call.1} parent=1 // pred_check_branch
      %33 = sbr.rel (0) target = $region21
    $region20: #{tpu_custom_call.1} parent=1 // pred_region
      %s35 = ssub.s32 16, 16
      %36 = vsyncadd [#allocation6], %s35
      %s38 = sshll.u32 [#allocation5], 4
      %s39 = int_to_ptr.vmem [resolvable:$true] %s38
      %41 = dma.hbm_to_vmem [thread:$0]  %s4, 16, %s39, [#allocation6]
    $region21: #{tpu_custom_call.1} parent=1 // pred_fallthru
      _
    // Predicated region
    $region22: #{tpu_custom_call.1} parent=1 // pred_check
      _
    $region23: #{tpu_custom_call.1} parent=1 // pred_check_branch
      %43 = sbr.rel (0) target = $region25
    $region24: #{tpu_custom_call.1} parent=1 // pred_region
      _
    $region25: #{tpu_custom_call.1} parent=1 // pred_fallthru
      _
    // Predicated region
    $region26: #{tpu_custom_call.1} parent=1 // pred_check
      _
    $region27: #{tpu_custom_call.1} parent=1 // pred_check_branch
      %45 = sbr.rel (0) target = $region29
    $region28: #{tpu_custom_call.1} parent=1 // pred_region
      %46 = dma.done [#allocation3], 256
    $region29: #{tpu_custom_call.1} parent=1 // pred_fallthru
      _
    // Predicated region
    $region30: #{tpu_custom_call.1} parent=1 // pred_check
      _
    $region31: #{tpu_custom_call.1} parent=1 // pred_check_branch
      %48 = sbr.rel (0) target = $region33
    $region32: #{tpu_custom_call.1} parent=1 // pred_region
      %49 = dma.done [#allocation6], 16
    $region33: #{tpu_custom_call.1} parent=1 // pred_fallthru
      _
    %v50 = vld [vmem:[%s0] sm:$0xff]
    %v51 = vld [vmem:[#allocation2] sm:$0xff]
    %v52 = vld [vmem:[#allocation2 + $0x8] sm:$0xff]
    %v53 = vld [vmem:[%s2] sm:$0x1]
    %v55 = vlaneseq
    %v56 = vshrl.u32 %v55, 7
    %v57 = vsub.s32 0, %v56
    %v58 = vrot.slane %v53, %v57
    %vm60 = vcmask 130048
    %v62 = vsel %vm60, %v50, 0
    %64 = vmatprep.subr.mxu0 0.0
    %65 = vmatpush1.msra.mxu0 0.0
    %66 = vmatprep.subr.mxu0 0.0
    %67 = vmatpush1.msra.mxu0 0.0
    %68 = vmatprep.subr.mxu0 0.0
    %69 = vmatpush1.msra.mxu0 0.0
    %70 = vmatprep.subr.mxu0 0.0
    %71 = vmatpush1.msra.mxu0 0.0
    %72 = vmatprep.subr.mxu0 0.0
    %73 = vmatpush1.msra.mxu0 0.0
    %74 = vmatprep.subr.mxu0 0.0
    %75 = vmatpush1.msra.mxu0 0.0
    %76 = vmatprep.subr.mxu0 0.0
    %77 = vmatpush1.msra.mxu0 0.0
    %78 = vmatprep.subr.mxu0 0.0
    %79 = vmatpush1.msra.mxu0 0.0
    %80 = vmatprep.subr.mxu0 0.0
    %81 = vmatpush1.msra.mxu0 0.0
    %82 = vmatprep.subr.mxu0 0.0
    %83 = vmatpush1.msra.mxu0 0.0
    %84 = vmatprep.subr.mxu0 0.0
    %85 = vmatpush1.msra.mxu0 0.0
    %86 = vmatprep.subr.mxu0 0.0
    %87 = vmatpush1.msra.mxu0 0.0
    %88 = vmatprep.subr.mxu0 0.0
    %89 = vmatpush1.msra.mxu0 0.0
    %90 = vmatprep.subr.mxu0 0.0
    %91 = vmatpush1.msra.mxu0 0.0
    %92 = vmatprep.subr.mxu0 0.0
    %93 = vmatpush1.msra.mxu0 %v52
    %94 = vmatprep.subr.mxu0 0.0
    %95 = vmatpush1.msra.mxu0 %v51
    %96 = vmatprep.subr.mxu0 0.0
    %97 = vmatpush2.msra.mxu0 0.0
    %98 = vmatprep.subr.mxu0 0.0
    %99 = vmatpush2.msra.mxu0 0.0
    %100 = vmatprep.subr.mxu0 0.0
    %101 = vmatpush2.msra.mxu0 0.0
    %102 = vmatprep.subr.mxu0 0.0
    %103 = vmatpush2.msra.mxu0 0.0
    %104 = vmatprep.subr.mxu0 0.0
    %105 = vmatpush2.msra.mxu0 0.0
    %106 = vmatprep.subr.mxu0 0.0
    %107 = vmatpush2.msra.mxu0 0.0
    %108 = vmatprep.subr.mxu0 0.0
    %109 = vmatpush2.msra.mxu0 0.0
    %110 = vmatprep.subr.mxu0 0.0
    %111 = vmatpush2.msra.mxu0 0.0
    %112 = vmatprep.subr.mxu0 0.0
    %113 = vmatpush2.msra.mxu0 0.0
    %114 = vmatprep.subr.mxu0 0.0
    %115 = vmatpush2.msra.mxu0 0.0
    %116 = vmatprep.subr.mxu0 0.0
    %117 = vmatpush2.msra.mxu0 0.0
    %118 = vmatprep.subr.mxu0 0.0
    %119 = vmatpush2.msra.mxu0 0.0
    %120 = vmatprep.subr.mxu0 0.0
    %121 = vmatpush2.msra.mxu0 0.0
    %122 = vmatprep.subr.mxu0 0.0
    %123 = vmatpush2.msra.mxu0 0.0
    %124 = vmatprep.subr.mxu0 0.0
    %125 = vmatpush2.msra.mxu0 0.0
    %126 = vmatprep.subr.mxu0 0.0
    %127 = vmatpush2.msra.mxu0 0.0
    %128 = vmatprep.mubr.f32.mxu0 0.0
    %129 = vmatmul.mubr.f32.gmra.mxu0 %v62
    %v130 = vpop.f32.mrf.mxu0
    %v131 = vadd.f32 %v58, %v130
    %v132 = vpop.f32.mrf.mxu0
    %133 = vdwg.mxu0
    %v134 = vtanh.pop %v131
    %v135 = vld [vmem:[%s3] sm:$0xff]
    %v136 = vld [vmem:[%s3 + $0x8] sm:$0xff]
    %v137 = vld [vmem:[%s3 + $0x10] sm:$0xff]
    %v138 = vld [vmem:[%s3 + $0x18] sm:$0xff]
    %v139 = vld [vmem:[#allocation5] sm:$0x1]
    %v141 = vlaneseq
    %v142 = vshrl.u32 %v141, 7
    %v143 = vsub.s32 0, %v142
    %v144 = vrot.slane %v139, %v143
    %vm146 = vcmask 261120
    %v148 = vsel %vm146, %v134, 0
    %150 = vmatprep.subr.mxu0 0.0
    %151 = vmatpush1.msra.mxu0 0.0
    %152 = vmatprep.subr.mxu0 0.0
    %153 = vmatpush1.msra.mxu0 0.0
    %154 = vmatprep.subr.mxu0 0.0
    %155 = vmatpush1.msra.mxu0 0.0
    %156 = vmatprep.subr.mxu0 0.0
    %157 = vmatpush1.msra.mxu0 0.0
    %158 = vmatprep.subr.mxu0 0.0
    %159 = vmatpush1.msra.mxu0 0.0
    %160 = vmatprep.subr.mxu0 0.0
    %161 = vmatpush1.msra.mxu0 0.0
    %162 = vmatprep.subr.mxu0 0.0
    %163 = vmatpush1.msra.mxu0 0.0
    %164 = vmatprep.subr.mxu0 0.0
    %165 = vmatpush1.msra.mxu0 0.0
    %166 = vmatprep.subr.mxu0 0.0
    %167 = vmatpush1.msra.mxu0 0.0
    %168 = vmatprep.subr.mxu0 0.0
    %169 = vmatpush1.msra.mxu0 0.0
    %170 = vmatprep.subr.mxu0 0.0
    %171 = vmatpush1.msra.mxu0 0.0
    %172 = vmatprep.subr.mxu0 0.0
    %173 = vmatpush1.msra.mxu0 0.0
    %174 = vmatprep.subr.mxu0 0.0
    %175 = vmatpush1.msra.mxu0 %v138
    %176 = vmatprep.subr.mxu0 0.0
    %177 = vmatpush1.msra.mxu0 %v137
    %178 = vmatprep.subr.mxu0 0.0
    %179 = vmatpush1.msra.mxu0 %v136
    %180 = vmatprep.subr.mxu0 0.0
    %181 = vmatpush1.msra.mxu0 %v135
    %182 = vmatprep.subr.mxu0 0.0
    %183 = vmatpush2.msra.mxu0 0.0
    %184 = vmatprep.subr.mxu0 0.0
    %185 = vmatpush2.msra.mxu0 0.0
    %186 = vmatprep.subr.mxu0 0.0
    %187 = vmatpush2.msra.mxu0 0.0
    %188 = vmatprep.subr.mxu0 0.0
    %189 = vmatpush2.msra.mxu0 0.0
    %190 = vmatprep.subr.mxu0 0.0
    %191 = vmatpush2.msra.mxu0 0.0
    %192 = vmatprep.subr.mxu0 0.0
    %193 = vmatpush2.msra.mxu0 0.0
    %194 = vmatprep.subr.mxu0 0.0
    %195 = vmatpush2.msra.mxu0 0.0
    %196 = vmatprep.subr.mxu0 0.0
    %197 = vmatpush2.msra.mxu0 0.0
    %198 = vmatprep.subr.mxu0 0.0
    %199 = vmatpush2.msra.mxu0 0.0
    %200 = vmatprep.subr.mxu0 0.0
    %201 = vmatpush2.msra.mxu0 0.0
    %202 = vmatprep.subr.mxu0 0.0
    %203 = vmatpush2.msra.mxu0 0.0
    %204 = vmatprep.subr.mxu0 0.0
    %205 = vmatpush2.msra.mxu0 0.0
    %206 = vmatprep.subr.mxu0 0.0
    %207 = vmatpush2.msra.mxu0 0.0
    %208 = vmatprep.subr.mxu0 0.0
    %209 = vmatpush2.msra.mxu0 0.0
    %210 = vmatprep.subr.mxu0 0.0
    %211 = vmatpush2.msra.mxu0 0.0
    %212 = vmatprep.subr.mxu0 0.0
    %213 = vmatpush2.msra.mxu0 0.0
    %214 = vmatprep.mubr.f32.mxu0 0.0
    %215 = vmatmul.mubr.f32.gmra.mxu0 %v148
    %v216 = vpop.f32.mrf.mxu0
    %v217 = vadd.f32 %v144, %v216
    %v218 = vpop.f32.mrf.mxu0
    %219 = vdwg.mxu0
    %v220 = vtanh.pop %v217
    %v221 = vld [vmem:[%s5] sm:$0xff]
    %v222 = vld [vmem:[%s5 + $0x8] sm:$0xff]
    %v223 = vld [vmem:[%s5 + $0x10] sm:$0xff]
    %v224 = vld [vmem:[%s5 + $0x18] sm:$0xff]
    %v226 = vsel %vm146, %v220, 0
    %228 = vmatprep.subr.mxu0 0.0
    %229 = vmatpush1.msra.mxu0 0.0
    %230 = vmatprep.subr.mxu0 0.0
    %231 = vmatpush1.msra.mxu0 0.0
    %232 = vmatprep.subr.mxu0 0.0
    %233 = vmatpush1.msra.mxu0 0.0
    %234 = vmatprep.subr.mxu0 0.0
    %235 = vmatpush1.msra.mxu0 0.0
    %236 = vmatprep.subr.mxu0 0.0
    %237 = vmatpush1.msra.mxu0 0.0
    %238 = vmatprep.subr.mxu0 0.0
    %239 = vmatpush1.msra.mxu0 0.0
    %240 = vmatprep.subr.mxu0 0.0
    %241 = vmatpush1.msra.mxu0 0.0
    %242 = vmatprep.subr.mxu0 0.0
    %243 = vmatpush1.msra.mxu0 0.0
    %244 = vmatprep.subr.mxu0 0.0
    %245 = vmatpush1.msra.mxu0 0.0
    %246 = vmatprep.subr.mxu0 0.0
    %247 = vmatpush1.msra.mxu0 0.0
    %248 = vmatprep.subr.mxu0 0.0
    %249 = vmatpush1.msra.mxu0 0.0
    %250 = vmatprep.subr.mxu0 0.0
    %251 = vmatpush1.msra.mxu0 0.0
    %252 = vmatprep.subr.mxu0 0.0
    %253 = vmatpush1.msra.mxu0 %v224
    %254 = vmatprep.subr.mxu0 0.0
    %255 = vmatpush1.msra.mxu0 %v223
    %256 = vmatprep.subr.mxu0 0.0
    %257 = vmatpush1.msra.mxu0 %v222
    %258 = vmatprep.subr.mxu0 0.0
    %259 = vmatpush1.msra.mxu0 %v221
    %260 = vmatprep.subr.mxu0 0.0
    %261 = vmatpush2.msra.mxu0 0.0
    %262 = vmatprep.subr.mxu0 0.0
    %263 = vmatpush2.msra.mxu0 0.0
    %264 = vmatprep.subr.mxu0 0.0
    %265 = vmatpush2.msra.mxu0 0.0
    %266 = vmatprep.subr.mxu0 0.0
    %267 = vmatpush2.msra.mxu0 0.0
    %268 = vmatprep.subr.mxu0 0.0
    %269 = vmatpush2.msra.mxu0 0.0
    %270 = vmatprep.subr.mxu0 0.0
    %271 = vmatpush2.msra.mxu0 0.0
    %272 = vmatprep.subr.mxu0 0.0
    %273 = vmatpush2.msra.mxu0 0.0
    %274 = vmatprep.subr.mxu0 0.0
    %275 = vmatpush2.msra.mxu0 0.0
    %276 = vmatprep.subr.mxu0 0.0
    %277 = vmatpush2.msra.mxu0 0.0
    %278 = vmatprep.subr.mxu0 0.0
    %279 = vmatpush2.msra.mxu0 0.0
    %280 = vmatprep.subr.mxu0 0.0
    %281 = vmatpush2.msra.mxu0 0.0
    %282 = vmatprep.subr.mxu0 0.0
    %283 = vmatpush2.msra.mxu0 0.0
    %284 = vmatprep.subr.mxu0 0.0
    %285 = vmatpush2.msra.mxu0 0.0
    %286 = vmatprep.subr.mxu0 0.0
    %287 = vmatpush2.msra.mxu0 0.0
    %288 = vmatprep.subr.mxu0 0.0
    %289 = vmatpush2.msra.mxu0 0.0
    %290 = vmatprep.subr.mxu0 0.0
    %291 = vmatpush2.msra.mxu0 0.0
    %292 = vmatprep.mubr.f32.mxu0 0.0
    %293 = vmatmul.mubr.f32.gmra.mxu0 %v226
    %v294 = vpop.f32.mrf.mxu0
    %v295 = vadd.f32 0.0, %v294
    %v296 = vpop.f32.mrf.mxu0
    %297 = vdwg.mxu0
    %vm298 = vcmask 64512
    %299 = vst.msk [vmem:[#allocation7] sm:$0xff] %vm298, %v295
    // Predicated region
    $region34: #{tpu_custom_call.1} parent=1 // pred_check
      _
    $region35: #{tpu_custom_call.1} parent=1 // pred_check_branch
      %301 = sbr.rel (0) target = $region37
    $region36: #{tpu_custom_call.1} parent=1 // pred_region
      %s303 = ssub.s32 128, 128
      %304 = vsyncadd [#allocation4], %s303
      %s306 = sshll.u32 [#allocation7], 4
      %s307 = int_to_ptr.vmem [resolvable:$true] %s306
      %309 = dma.vmem_to_hbm [thread:$0]  %s307, 128, %s6, [#allocation4]
    $region37: #{tpu_custom_call.1} parent=1 // pred_fallthru
      _
    // Predicated region
    $region38: #{tpu_custom_call.1} parent=1 // pred_check
      _
    $region39: #{tpu_custom_call.1} parent=1 // pred_check_branch
      %311 = sbr.rel (0) target = $region41
    $region40: #{tpu_custom_call.1} parent=1 // pred_region
      %312 = dma.done [#allocation4], 128
    $region41: #{tpu_custom_call.1} parent=1 // pred_fallthru
      _
    %313 = vsyncpa [#allocation3], 1
    %314 = vsyncpa [#allocation6], 1
    %315 = vsyncpa [#allocation4], 1

</llo_original>
